<compile_context>
chip_gen: v5e
topology: v5e:2x2
jax: 0.10.0
libtpu: 0.0.40
codegen_flags: <defaults>
</compile_context>

<pallas_src>
import jax
import jax.numpy as jnp
from jax.experimental import pallas as pl
from jax.experimental.pallas import tpu as pltpu


def point_descriptor_kernel(x_ref, w_ref, shift_ref, o_ref):
    # x_ref:     (1, 3, TL)  face-center coords for one mesh tile (NCL layout)
    # w_ref:     (K, 3)      conv weight with BN scale folded in
    # shift_ref: (K, 1)      folded shift = beta - mean*scale + bias*scale
    # o_ref:     (1, K, TL)
    x = x_ref[0]                       # (3, TL)
    w = w_ref[...]                     # (K, 3)
    # Contraction = 3 -> three VPU broadcast multiply-adds (MXU would be <3%
    # utilized and needs an awkward 3-lane operand layout).
    acc = w[:, 0:1] * x[0:1, :]        # (K, TL)
    acc = acc + w[:, 1:2] * x[1:2, :]
    acc = acc + w[:, 2:3] * x[2:3, :]
    y = acc + shift_ref[...]           # (K, 1) broadcast over lanes
    o_ref[0] = jnp.maximum(y, 0.0).astype(o_ref.dtype)


def _round_up(x, m):
    return (x + m - 1) // m * m


def point_descriptor(centers_ncl, weight, bias, gamma, beta,
                     running_mean, running_var, eps=1e-5, tile_l=2048):
    """centers_ncl: (N, 3, L) float32, matching the PyTorch Conv1d NCL input.
    Returns (N, K, L) float32, matching the PyTorch module output."""
    N, C, L = centers_ncl.shape
    assert C == 3
    K = weight.shape[0]

    # Fold BatchNorm (inference) + conv bias into the weight / a per-channel shift.
    scale = gamma / jnp.sqrt(running_var + eps)                          # (K,)
    w_folded = (weight * scale[:, None]).astype(jnp.float32)            # (K, 3)
    shift = (beta - running_mean * scale + bias * scale)                 # (K,)
    shift = shift.reshape(K, 1).astype(jnp.float32)                      # (K, 1)

    # Ragged L: clamp the lane tile to a 128-multiple no larger than needed,
    # pad L up to a multiple of it (pad cost is tiny: only 3 input channels).
    tile_l_eff = min(tile_l, _round_up(L, 128))
    L_pad = _round_up(L, tile_l_eff)
    x = centers_ncl
    if L_pad != L:
        x = jnp.pad(x, ((0, 0), (0, 0), (0, L_pad - L)))

    grid = (N, L_pad // tile_l_eff)

    cost = pl.CostEstimate(
        flops=2 * N * L_pad * 3 * K,
        transcendentals=0,
        bytes_accessed=4 * (N * L_pad * 3 + N * L_pad * K + K * 3 + K),
    )

    out = pl.pallas_call(
        point_descriptor_kernel,
        out_shape=jax.ShapeDtypeStruct((N, K, L_pad), jnp.float32),
        grid_spec=pltpu.PrefetchScalarGridSpec(
            num_scalar_prefetch=0,
            grid=grid,
            in_specs=[
                pl.BlockSpec((1, 3, tile_l_eff), lambda n, l: (n, 0, l)),
                pl.BlockSpec((K, 3), lambda n, l: (0, 0)),
                pl.BlockSpec((K, 1), lambda n, l: (0, 0)),
            ],
            out_specs=pl.BlockSpec((1, K, tile_l_eff), lambda n, l: (n, 0, l)),
        ),
        compiler_params=pltpu.CompilerParams(
            dimension_semantics=("parallel", "parallel")),
        cost_estimate=cost,
    )(x, w_folded, shift)

    if L_pad != L:
        out = out[:, :, :L]
    return out


def reference(centers_ncl, weight, bias, gamma, beta, running_mean, running_var, eps=1e-5):
    # Pure-JAX reference of Conv1d(k=1) + BN(eval) + ReLU.
    y = jnp.einsum("ncl,kc->nkl", centers_ncl, weight) + bias[None, :, None]
    y = (y - running_mean[None, :, None]) / jnp.sqrt(running_var[None, :, None] + eps)
    y = y * gamma[None, :, None] + beta[None, :, None]
    return jnp.maximum(y, 0.0)


if __name__ == "__main__":
    key = jax.random.PRNGKey(0)
    num_meshes, num_faces, num_kernel = 2, 200, 64   # ragged L exercises padding path

    k1, k2, k3 = jax.random.split(key, 3)
    # centers in NCL layout (num_meshes, 3, num_faces), as Conv1d requires.
    centers = jax.random.normal(k1, (num_meshes, 3, num_faces), dtype=jnp.float32)

    # Parameters (shapes from nn.Conv1d(3, K, 1) + BatchNorm1d(K)).
    weight = jax.random.normal(k2, (num_kernel, 3), dtype=jnp.float32) * 0.1   # conv weight (K,3,1)->(K,3)
    bias = jax.random.normal(k3, (num_kernel,), dtype=jnp.float32) * 0.1       # conv bias
    gamma = jnp.ones((num_kernel,), jnp.float32)
    beta = jnp.zeros((num_kernel,), jnp.float32)
    running_mean = jnp.zeros((num_kernel,), jnp.float32)
    running_var = jnp.ones((num_kernel,), jnp.float32)

    out = point_descriptor(centers, weight, bias, gamma, beta, running_mean, running_var)
    out = jax.block_until_ready(out)

    ref = reference(centers, weight, bias, gamma, beta, running_mean, running_var)
    assert out.shape == (num_meshes, num_kernel, num_faces)
    assert jnp.allclose(out, ref, atol=1e-5, rtol=1e-5)

    print("KERNEL_OK")
</pallas_src>

<mosaic_0001>
module attributes {stable_mosaic.version = 11 : i64} {
  func.func @point_descriptor_kernel(%arg0: i32, %arg1: i32, %arg2: memref<1x3x256xf32, #tpu.memory_space<vmem>>, %arg3: memref<64x3xf32, #tpu.memory_space<vmem>>, %arg4: memref<64x1xf32, #tpu.memory_space<vmem>>, %arg5: memref<1x64x256xf32, #tpu.memory_space<vmem>>) attributes {dimension_semantics = [#tpu.dimension_semantics<parallel>, #tpu.dimension_semantics<parallel>], iteration_bounds = array<i64: 2, 1>, scalar_prefetch = 0 : i64, scratch_operands = 0 : i64, tpu.core_type = #tpu.core_type<tc>, window_params = [{transform_indices = @transform_0, window_bounds = array<i64: 1, 3, 256>}, {pipeline_mode = #tpu.pipeline_mode<synchronous>, transform_indices = @transform_1, window_bounds = array<i64: 64, 3>}, {pipeline_mode = #tpu.pipeline_mode<synchronous>, transform_indices = @transform_2, window_bounds = array<i64: 64, 1>}, {transform_indices = @transform_3, window_bounds = array<i64: 1, 64, 256>}]} {
    %c0 = arith.constant 0 : index
    %c0_0 = arith.constant 0 : index
    %c0_1 = arith.constant 0 : index
    %0 = vector.load %arg2[%c0, %c0_0, %c0_1] : memref<1x3x256xf32, #tpu.memory_space<vmem>>, vector<1x3x256xf32>
    %1 = vector.shape_cast %0 : vector<1x3x256xf32> to vector<3x256xf32>
    %c0_2 = arith.constant 0 : index
    %c0_3 = arith.constant 0 : index
    %2 = vector.load %arg3[%c0_2, %c0_3] : memref<64x3xf32, #tpu.memory_space<vmem>>, vector<64x3xf32>
    %3 = vector.extract_strided_slice %2 {offsets = [0, 0], sizes = [64, 1], strides = [1, 1]} : vector<64x3xf32> to vector<64x1xf32>
    %4 = vector.extract_strided_slice %1 {offsets = [0, 0], sizes = [1, 256], strides = [1, 1]} : vector<3x256xf32> to vector<1x256xf32>
    %5 = vector.broadcast %3 : vector<64x1xf32> to vector<64x256xf32>
    %6 = vector.broadcast %4 : vector<1x256xf32> to vector<64x256xf32>
    %7 = arith.mulf %5, %6 : vector<64x256xf32>
    %8 = vector.extract_strided_slice %2 {offsets = [0, 1], sizes = [64, 1], strides = [1, 1]} : vector<64x3xf32> to vector<64x1xf32>
    %9 = vector.extract_strided_slice %1 {offsets = [1, 0], sizes = [1, 256], strides = [1, 1]} : vector<3x256xf32> to vector<1x256xf32>
    %10 = vector.broadcast %8 : vector<64x1xf32> to vector<64x256xf32>
    %11 = vector.broadcast %9 : vector<1x256xf32> to vector<64x256xf32>
    %12 = arith.mulf %10, %11 : vector<64x256xf32>
    %13 = arith.addf %7, %12 : vector<64x256xf32>
    %14 = vector.extract_strided_slice %2 {offsets = [0, 2], sizes = [64, 1], strides = [1, 1]} : vector<64x3xf32> to vector<64x1xf32>
    %15 = vector.extract_strided_slice %1 {offsets = [2, 0], sizes = [1, 256], strides = [1, 1]} : vector<3x256xf32> to vector<1x256xf32>
    %16 = vector.broadcast %14 : vector<64x1xf32> to vector<64x256xf32>
    %17 = vector.broadcast %15 : vector<1x256xf32> to vector<64x256xf32>
    %18 = arith.mulf %16, %17 : vector<64x256xf32>
    %19 = arith.addf %13, %18 : vector<64x256xf32>
    %c0_4 = arith.constant 0 : index
    %c0_5 = arith.constant 0 : index
    %20 = vector.load %arg4[%c0_4, %c0_5] : memref<64x1xf32, #tpu.memory_space<vmem>>, vector<64x1xf32>
    %21 = vector.broadcast %20 : vector<64x1xf32> to vector<64x256xf32>
    %22 = arith.addf %19, %21 : vector<64x256xf32>
    %cst = arith.constant 0.000000e+00 : f32
    %23 = vector.broadcast %cst : f32 to vector<64x256xf32>
    %24 = arith.maximumf %22, %23 : vector<64x256xf32>
    %c0_6 = arith.constant 0 : index
    %c0_7 = arith.constant 0 : index
    %c0_8 = arith.constant 0 : index
    %25 = vector.load %arg5[%c0_6, %c0_7, %c0_8] : memref<1x64x256xf32, #tpu.memory_space<vmem>>, vector<1x64x256xf32>
    %26 = vector.shape_cast %25 : vector<1x64x256xf32> to vector<64x256xf32>
    %27 = vector.shape_cast %24 : vector<64x256xf32> to vector<1x64x256xf32>
    tpu.vector_store %arg5[%c0_6, %c0_7, %c0_8], %27 {strides = array<i32>} : memref<1x64x256xf32, #tpu.memory_space<vmem>>, vector<1x64x256xf32>,
    return
  }
  func.func @transform_0(%arg0: i32, %arg1: i32) -> (i32, i32, i32) {
    %c0_i32 = arith.constant 0 : i32
    %c0_i32_0 = arith.constant 0 : i32
    return %arg0, %c0_i32, %arg1 : i32, i32, i32
  }
  func.func @transform_1(%arg0: i32, %arg1: i32) -> (i32, i32) {
    %c0_i32 = arith.constant 0 : i32
    %c0_i32_0 = arith.constant 0 : i32
    %c0_i32_1 = arith.constant 0 : i32
    return %c0_i32, %c0_i32_0 : i32, i32
  }
  func.func @transform_2(%arg0: i32, %arg1: i32) -> (i32, i32) {
    %c0_i32 = arith.constant 0 : i32
    %c0_i32_0 = arith.constant 0 : i32
    %c0_i32_1 = arith.constant 0 : i32
    return %c0_i32, %c0_i32_0 : i32, i32
  }
  func.func @transform_3(%arg0: i32, %arg1: i32) -> (i32, i32, i32) {
    %c0_i32 = arith.constant 0 : i32
    %c0_i32_0 = arith.constant 0 : i32
    return %arg0, %c0_i32, %arg1 : i32, i32, i32
  }
}

</mosaic_0001>

<llo_original>
// kernel: tpu_custom_call.1
$region0: #{tpu_custom_call.1}
  #allocation0 [shape = 'u32[]', space=smem, size = 0x4, offset = 0x4, fixed_abs, tag = 'smem constant byte address 0x4 - core index']
  #allocation1 [shape = 'u32[72,128]{1,0:T(1,128)}', space=vmem, size = 0x9000, scoped, tag = 'internal scratch']
  %s0 = inlined_call_operand.vmem [shape: f32[2,3,256], index: 0, kind: input, shape index: {}]
  %s1 = inlined_call_operand.vmem [shape: f32[64,3], index: 1, kind: input, shape index: {}]
  %s2 = inlined_call_operand.vmem [shape: f32[64,1], index: 2, kind: input, shape index: {}]
  %s3 = inlined_call_operand.hbm [shape: f32[2,64,256], index: 3, kind: output, shape index: {}]
  %s4 = sld [smem:[#allocation0]]
  $region45: #{tpu_custom_call.1} parent=0
    _
  %s6 = ssub.s32 1, %s4
  %s7 = scalar_select 0, %s6, %s4
  $region1: #{tpu_custom_call.1} parent=0
    #allocation2 [shape = 'u8[131072]{0}', space=vmem, size = 0x20000, scoped, tag = 'output window, operand 0']
    #allocation3 [shape = 's32[2]{0}', space=sflag, size = 0x8, scoped, tag = 'scoped memory for tpu_custom_call.1']
    %8 = vsyncpa [#allocation3], 0
    %s9 = scalar_lea.sflag [#allocation3], 1
    %10 = vsyncpa %s9, 0
    loop: start=0, step=1, limit=4
    $region2: #{tpu_custom_call.1} parent=1 // loop_pre_header
      _
    $region3: #{tpu_custom_call.1} parent=1 // loop_header
      %s12 = sphi 0, %s16
      %p13 = scmp.ge.s32.totalorder %s12, 4
      %s19 = sphi 0, %s31
      %s20 = sphi 0, %s27
      %s21 = sphi 0, %s19
      %s22 = sphi 0, %s20
      %s23 = sphi 0, %s21
      %s24 = sphi 0, %s22
      %s36 = sphi 0, %s38
      %s39 = sphi 0, %s36
      %s40 = sphi 0, %s39
      %s56 = sphi 0, %s40
      %s60 = sphi 0, %s60
      %s62 = sphi 0, %s60
      %s63 = sphi 0, %s62
      %s77 = sphi 0, %s63
      %s81 = sphi 0, %s81
      %s83 = sphi 0, %s81
      %s84 = sphi 0, %s83
      %s98 = sphi 0, %s84
      %s106 = sphi 0, %s108
      %s109 = sphi 0, %s106
      %s110 = sphi 0, %s109
      %s126 = sphi 0, %s110
    $region4: #{tpu_custom_call.1} parent=1 // loop_header_branch
      %15 = sbr.rel (%p13) target = $region8
    $region5: #{tpu_custom_call.1} parent=1 // loop_body
      %s17 = ssub.s32 %s12, 1
      %s18 = ssub.s32 %s12, 2
      %s25 = sadd.s32 1, %s20
      %p26 = scmp.ge.s32.totalorder %s25, 1
      %s27 = scalar_select %p26, 0, %s25
      %s28 = sadd.s32 1, %s19
      %s29 = scalar_select %p26, %s28, %s19
      %p30 = scmp.ge.s32.totalorder %s29, 2
      %s31 = scalar_select %p30, 0, %s29
      %s32 = ssub.s32 %s19, %s31
      %s33 = ssub.s32 %s20, %s27
      %s34 = sor.u32 %s32, %s33
      %p35 = scmp.eq.s32.totalorder %s34, 0
      %s37 = sadd.s32 %s36, 1
      %s38 = scalar_select %p35, %s36, %s37
      %p41 = pneg %p35
      %p42 = scmp.eq.s32.totalorder %s12, 1
      %p43 = por %p41, %p42
      %p44 = scmp.ne.s32.totalorder %s36, %s39
      %p45 = scmp.eq.s32.totalorder %s12, 0
      %p46 = por %p44, %p45
      %p47 = scmp.ne.s32.totalorder %s36, %s39
      %p48 = scmp.eq.s32.totalorder %s17, 1
      %p49 = por %p47, %p48
      %p50 = scmp.ne.s32.totalorder %s39, %s40
      %p51 = scmp.eq.s32.totalorder %s17, 0
      %p52 = por %p50, %p51
      %p53 = scmp.ne.s32.totalorder %s39, %s40
      %p54 = scmp.eq.s32.totalorder %s18, 1
      %p55 = por %p53, %p54
      %p57 = scmp.ne.s32.totalorder %s40, %s56
      %p58 = scmp.eq.s32.totalorder %s18, 0
      %p59 = por %p57, %p58
      %s61 = sadd.s32 %s60, 1
      %p64 = scmp.eq.s32.totalorder %s12, 1
      %p65 = scmp.ne.s32.totalorder %s60, %s62
      %p66 = scmp.eq.s32.totalorder %s12, 0
      %p67 = por %p65, %p66
      %p68 = scmp.ne.s32.totalorder %s60, %s62
      %p69 = scmp.eq.s32.totalorder %s17, 1
      %p70 = por %p68, %p69
      %p71 = scmp.ne.s32.totalorder %s62, %s63
      %p72 = scmp.eq.s32.totalorder %s17, 0
      %p73 = por %p71, %p72
      %p74 = scmp.ne.s32.totalorder %s62, %s63
      %p75 = scmp.eq.s32.totalorder %s18, 1
      %p76 = por %p74, %p75
      %p78 = scmp.ne.s32.totalorder %s63, %s77
      %p79 = scmp.eq.s32.totalorder %s18, 0
      %p80 = por %p78, %p79
      %s82 = sadd.s32 %s81, 1
      %p85 = scmp.eq.s32.totalorder %s12, 1
      %p86 = scmp.ne.s32.totalorder %s81, %s83
      %p87 = scmp.eq.s32.totalorder %s12, 0
      %p88 = por %p86, %p87
      %p89 = scmp.ne.s32.totalorder %s81, %s83
      %p90 = scmp.eq.s32.totalorder %s17, 1
      %p91 = por %p89, %p90
      %p92 = scmp.ne.s32.totalorder %s83, %s84
      %p93 = scmp.eq.s32.totalorder %s17, 0
      %p94 = por %p92, %p93
      %p95 = scmp.ne.s32.totalorder %s83, %s84
      %p96 = scmp.eq.s32.totalorder %s18, 1
      %p97 = por %p95, %p96
      %p99 = scmp.ne.s32.totalorder %s84, %s98
      %p100 = scmp.eq.s32.totalorder %s18, 0
      %p101 = por %p99, %p100
      %s102 = ssub.s32 %s19, %s31
      %s103 = ssub.s32 %s20, %s27
      %s104 = sor.u32 %s102, %s103
      %p105 = scmp.eq.s32.totalorder %s104, 0
      %s107 = sadd.s32 %s106, 1
      %s108 = scalar_select %p105, %s106, %s107
      %p111 = pneg %p105
      %p112 = scmp.eq.s32.totalorder %s12, 1
      %p113 = por %p111, %p112
      %p114 = scmp.ne.s32.totalorder %s106, %s109
      %p115 = scmp.eq.s32.totalorder %s12, 0
      %p116 = por %p114, %p115
      %p117 = scmp.ne.s32.totalorder %s106, %s109
      %p118 = scmp.eq.s32.totalorder %s17, 1
      %p119 = por %p117, %p118
      %p120 = scmp.ne.s32.totalorder %s109, %s110
      %p121 = scmp.eq.s32.totalorder %s17, 0
      %p122 = por %p120, %p121
      %p123 = scmp.ne.s32.totalorder %s109, %s110
      %p124 = scmp.eq.s32.totalorder %s18, 1
      %p125 = por %p123, %p124
      %p127 = scmp.ne.s32.totalorder %s110, %s126
      %p128 = scmp.eq.s32.totalorder %s18, 0
      %p129 = por %p127, %p128
      %p130 = scmp.le.s32.totalorder 1, %s12
      %p131 = scmp.lt.s32.totalorder %s12, 3
      %p132 = pnand %p130, %p131
      %p133 = pneg %p132
      // Predicated region
      $region9: #{tpu_custom_call.1} parent=5 // pred_check
        _
      $region10: #{tpu_custom_call.1} parent=5 // pred_check_branch
        %135 = sbr.rel (%p132) target = $region12
      $region11: #{tpu_custom_call.1} parent=5 // pred_region
        %s136 = ssub.s32 %s12, 1
        // Predicated region
        $region13: #{tpu_custom_call.1} parent=11 // pred_check
          %p137 = pneg %p73
        $region14: #{tpu_custom_call.1} parent=11 // pred_check_branch
          %139 = sbr.rel (%p137) target = $region16
        $region15: #{tpu_custom_call.1} parent=11 // pred_region
          _
        $region16: #{tpu_custom_call.1} parent=11 // pred_fallthru
          _
        // Predicated region
        $region17: #{tpu_custom_call.1} parent=11 // pred_check
          %p140 = pneg %p94
        $region18: #{tpu_custom_call.1} parent=11 // pred_check_branch
          %142 = sbr.rel (%p140) target = $region20
        $region19: #{tpu_custom_call.1} parent=11 // pred_region
          _
        $region20: #{tpu_custom_call.1} parent=11 // pred_fallthru
          _
      $region12: #{tpu_custom_call.1} parent=5 // pred_fallthru
        _
      %p143 = scmp.lt.s32.totalorder %s12, 2
      // Predicated region
      $region21: #{tpu_custom_call.1} parent=5 // pred_check
        %p144 = pneg %p143
      $region22: #{tpu_custom_call.1} parent=5 // pred_check_branch
        %146 = sbr.rel (%p144) target = $region24
      $region23: #{tpu_custom_call.1} parent=5 // pred_region
        // Predicated region
        $region25: #{tpu_custom_call.1} parent=23 // pred_check
          %p147 = pneg %p46
        $region26: #{tpu_custom_call.1} parent=23 // pred_check_branch
          %149 = sbr.rel (%p147) target = $region28
        $region27: #{tpu_custom_call.1} parent=23 // pred_region
          %s150 = smul.u32 2, %s20
          %p151 = scmp.lt.s32.totalorder %s19, 1
          %s152 = scalar_select %p151, %s19, 1
          %p153 = scmp.lt.s32.totalorder %s150, 1
          %s154 = scalar_select %p153, %s150, 1
          %s155 = smul.addr %s152, 2
          %s156 = sadd.s32 %s154, %s155
          %s157 = smul.addr %s156, 4
          %s158 = scalar_lea.vmem %s0, %s157
          %s159 = smul.u32 2, %s20
        $region28: #{tpu_custom_call.1} parent=23 // pred_fallthru
          _
      $region24: #{tpu_custom_call.1} parent=5 // pred_fallthru
        _
      %p160 = scmp.le.s32.totalorder 1, %s12
      %p161 = scmp.lt.s32.totalorder %s12, 3
      %p162 = pnand %p160, %p161
      %p163 = pneg %p162
      // Predicated region
      $region29: #{tpu_custom_call.1} parent=5 // pred_check
        _
      $region30: #{tpu_custom_call.1} parent=5 // pred_check_branch
        %165 = sbr.rel (%p162) target = $region32
      $region31: #{tpu_custom_call.1} parent=5 // pred_region
        %s166 = ssub.s32 %s12, 1
        %s167 = smul.u32 2, %s22
        %p168 = scmp.lt.s32.totalorder %s21, 1
        %s169 = scalar_select %p168, %s21, 1
        %p170 = scmp.lt.s32.totalorder %s167, 1
        %s171 = scalar_select %p170, %s167, 1
        %s172 = smul.addr %s169, 2
        %s173 = sadd.s32 %s171, %s172
        %s174 = smul.addr %s173, 4
        %s175 = scalar_lea.vmem %s0, %s174
        %p176 = pneg %p52
        %p177 = pneg %p49
        %p178 = pneg %p73
        %p179 = pneg %p70
        %p180 = pneg %p94
        %p181 = pneg %p91
        %p182 = pneg %p122
        %p183 = pneg %p119
        %s184 = sand.u32 %s109, 1
        %s185 = scalar_lea.sflag [#allocation3], %s184
        %s186 = sand.u32 %s109, 1
        %s187 = smul.addr %s186, 128
        %s188 = scalar_lea.vmem [#allocation2], %s187
        %s189 = smul.u32 2, %s22
        %p190 = scmp.lt.s32.totalorder %s21, 1
        %s191 = scalar_select %p190, %s21, 1
        %p192 = scmp.lt.s32.totalorder %s189, 1
        %s193 = scalar_select %p192, %s189, 1
        %s194 = smul.addr %s191, 2
        %s195 = sadd.s32 %s193, %s194
        %s196 = smul.addr %s195, 4
        %s197 = scalar_lea.vmem %s0, %s196
        %s198 = smul.u32 2, %s22
        %s199 = smul.u32 2, %s22
        %v200 = vld [vmem:[%s197] sm:$0x77]
        %v201 = vld [vmem:[%s1] sm:$0xff]
        %v202 = vld [vmem:[%s1 + $0x8] sm:$0xff]
        %v203 = vld [vmem:[%s1 + $0x10] sm:$0xff]
        %v204 = vld [vmem:[%s1 + $0x18] sm:$0xff]
        %v205 = vld [vmem:[%s1 + $0x20] sm:$0xff]
        %v206 = vld [vmem:[%s1 + $0x28] sm:$0xff]
        %v207 = vld [vmem:[%s1 + $0x30] sm:$0xff]
        %v208 = vld [vmem:[%s1 + $0x38] sm:$0xff]
        %210 = vset.pattern.permute.xlu0 0
        %211 = vperm.xlu0 %210, %v201
        %v212 = vpop.permute.xlu0 %211
        %215 = vset.pattern.permute.xlu0 0
        %216 = vperm.xlu0 %215, %v202
        %v217 = vpop.permute.xlu0 %216
        %220 = vset.pattern.permute.xlu0 0
        %221 = vperm.xlu0 %220, %v203
        %v222 = vpop.permute.xlu0 %221
        %225 = vset.pattern.permute.xlu0 0
        %226 = vperm.xlu0 %225, %v204
        %v227 = vpop.permute.xlu0 %226
        %230 = vset.pattern.permute.xlu0 0
        %231 = vperm.xlu0 %230, %v205
        %v232 = vpop.permute.xlu0 %231
        %235 = vset.pattern.permute.xlu0 0
        %236 = vperm.xlu0 %235, %v206
        %v237 = vpop.permute.xlu0 %236
        %240 = vset.pattern.permute.xlu0 0
        %241 = vperm.xlu0 %240, %v207
        %v242 = vpop.permute.xlu0 %241
        %245 = vset.pattern.permute.xlu0 0
        %246 = vperm.xlu0 %245, %v208
        %v247 = vpop.permute.xlu0 %246
        %v250 = vperm.slane %v200, 0
        %v251 = vperm.slane %v200, 4
        %v254 = vperm.slane %v250, 0
        %v255 = vperm.slane %v251, 0
        %v256 = vmul.f32 %v212, %v254
        %v257 = vmul.f32 %v212, %v255
        %v258 = vmul.f32 %v217, %v254
        %v259 = vmul.f32 %v217, %v255
        %v260 = vmul.f32 %v222, %v254
        %v261 = vmul.f32 %v222, %v255
        %v262 = vmul.f32 %v227, %v254
        %v263 = vmul.f32 %v227, %v255
        %v264 = vmul.f32 %v232, %v254
        %v265 = vmul.f32 %v232, %v255
        %v266 = vmul.f32 %v237, %v254
        %v267 = vmul.f32 %v237, %v255
        %v268 = vmul.f32 %v242, %v254
        %v269 = vmul.f32 %v242, %v255
        %v270 = vmul.f32 %v247, %v254
        %v271 = vmul.f32 %v247, %v255
        %272 = vset.pattern.permute.xlu0 1
        %273 = vperm.xlu0 %272, %v201
        %v274 = vpop.permute.xlu0 %273
        %276 = vset.pattern.permute.xlu0 1
        %277 = vperm.xlu0 %276, %v202
        %v278 = vpop.permute.xlu0 %277
        %280 = vset.pattern.permute.xlu0 1
        %281 = vperm.xlu0 %280, %v203
        %v282 = vpop.permute.xlu0 %281
        %284 = vset.pattern.permute.xlu0 1
        %285 = vperm.xlu0 %284, %v204
        %v286 = vpop.permute.xlu0 %285
        %288 = vset.pattern.permute.xlu0 1
        %289 = vperm.xlu0 %288, %v205
        %v290 = vpop.permute.xlu0 %289
        %292 = vset.pattern.permute.xlu0 1
        %293 = vperm.xlu0 %292, %v206
        %v294 = vpop.permute.xlu0 %293
        %296 = vset.pattern.permute.xlu0 1
        %297 = vperm.xlu0 %296, %v207
        %v298 = vpop.permute.xlu0 %297
        %300 = vset.pattern.permute.xlu0 1
        %301 = vperm.xlu0 %300, %v208
        %v302 = vpop.permute.xlu0 %301
        %v304 = vperm.slane %v200, 1
        %v305 = vperm.slane %v200, 5
        %v308 = vperm.slane %v304, 1
        %v309 = vperm.slane %v305, 1
        %v310 = vmul.f32 %v274, %v308
        %v311 = vmul.f32 %v274, %v309
        %v312 = vmul.f32 %v278, %v308
        %v313 = vmul.f32 %v278, %v309
        %v314 = vmul.f32 %v282, %v308
        %v315 = vmul.f32 %v282, %v309
        %v316 = vmul.f32 %v286, %v308
        %v317 = vmul.f32 %v286, %v309
        %v318 = vmul.f32 %v290, %v308
        %v319 = vmul.f32 %v290, %v309
        %v320 = vmul.f32 %v294, %v308
        %v321 = vmul.f32 %v294, %v309
        %v322 = vmul.f32 %v298, %v308
        %v323 = vmul.f32 %v298, %v309
        %v324 = vmul.f32 %v302, %v308
        %v325 = vmul.f32 %v302, %v309
        %v326 = vadd.f32 %v256, %v310
        %v327 = vadd.f32 %v257, %v311
        %v328 = vadd.f32 %v258, %v312
        %v329 = vadd.f32 %v259, %v313
        %v330 = vadd.f32 %v260, %v314
        %v331 = vadd.f32 %v261, %v315
        %v332 = vadd.f32 %v262, %v316
        %v333 = vadd.f32 %v263, %v317
        %v334 = vadd.f32 %v264, %v318
        %v335 = vadd.f32 %v265, %v319
        %v336 = vadd.f32 %v266, %v320
        %v337 = vadd.f32 %v267, %v321
        %v338 = vadd.f32 %v268, %v322
        %v339 = vadd.f32 %v269, %v323
        %v340 = vadd.f32 %v270, %v324
        %v341 = vadd.f32 %v271, %v325
        %342 = vset.pattern.permute.xlu0 2
        %343 = vperm.xlu0 %342, %v201
        %v344 = vpop.permute.xlu0 %343
        %346 = vset.pattern.permute.xlu0 2
        %347 = vperm.xlu0 %346, %v202
        %v348 = vpop.permute.xlu0 %347
        %350 = vset.pattern.permute.xlu0 2
        %351 = vperm.xlu0 %350, %v203
        %v352 = vpop.permute.xlu0 %351
        %354 = vset.pattern.permute.xlu0 2
        %355 = vperm.xlu0 %354, %v204
        %v356 = vpop.permute.xlu0 %355
        %358 = vset.pattern.permute.xlu0 2
        %359 = vperm.xlu0 %358, %v205
        %v360 = vpop.permute.xlu0 %359
        %362 = vset.pattern.permute.xlu0 2
        %363 = vperm.xlu0 %362, %v206
        %v364 = vpop.permute.xlu0 %363
        %366 = vset.pattern.permute.xlu0 2
        %367 = vperm.xlu0 %366, %v207
        %v368 = vpop.permute.xlu0 %367
        %370 = vset.pattern.permute.xlu0 2
        %371 = vperm.xlu0 %370, %v208
        %v372 = vpop.permute.xlu0 %371
        %v374 = vperm.slane %v200, 2
        %v375 = vperm.slane %v200, 6
        %v378 = vperm.slane %v374, 2
        %v379 = vperm.slane %v375, 2
        %v380 = vmul.f32 %v344, %v378
        %v381 = vmul.f32 %v344, %v379
        %v382 = vmul.f32 %v348, %v378
        %v383 = vmul.f32 %v348, %v379
        %v384 = vmul.f32 %v352, %v378
        %v385 = vmul.f32 %v352, %v379
        %v386 = vmul.f32 %v356, %v378
        %v387 = vmul.f32 %v356, %v379
        %v388 = vmul.f32 %v360, %v378
        %v389 = vmul.f32 %v360, %v379
        %v390 = vmul.f32 %v364, %v378
        %v391 = vmul.f32 %v364, %v379
        %v392 = vmul.f32 %v368, %v378
        %v393 = vmul.f32 %v368, %v379
        %v394 = vmul.f32 %v372, %v378
        %v395 = vmul.f32 %v372, %v379
        %v396 = vadd.f32 %v326, %v380
        %v397 = vadd.f32 %v327, %v381
        %v398 = vadd.f32 %v328, %v382
        %v399 = vadd.f32 %v329, %v383
        %v400 = vadd.f32 %v330, %v384
        %v401 = vadd.f32 %v331, %v385
        %v402 = vadd.f32 %v332, %v386
        %v403 = vadd.f32 %v333, %v387
        %v404 = vadd.f32 %v334, %v388
        %v405 = vadd.f32 %v335, %v389
        %v406 = vadd.f32 %v336, %v390
        %v407 = vadd.f32 %v337, %v391
        %v408 = vadd.f32 %v338, %v392
        %v409 = vadd.f32 %v339, %v393
        %v410 = vadd.f32 %v340, %v394
        %v411 = vadd.f32 %v341, %v395
        %v412 = vld [vmem:[%s2] sm:$0xff]
        %v413 = vld [vmem:[%s2 + $0x8] sm:$0xff]
        %v414 = vld [vmem:[%s2 + $0x10] sm:$0xff]
        %v415 = vld [vmem:[%s2 + $0x18] sm:$0xff]
        %v416 = vld [vmem:[%s2 + $0x20] sm:$0xff]
        %v417 = vld [vmem:[%s2 + $0x28] sm:$0xff]
        %v418 = vld [vmem:[%s2 + $0x30] sm:$0xff]
        %v419 = vld [vmem:[%s2 + $0x38] sm:$0xff]
        %421 = vset.pattern.permute.xlu0 0
        %422 = vperm.xlu0 %421, %v412
        %v423 = vpop.permute.xlu0 %422
        %426 = vset.pattern.permute.xlu0 0
        %427 = vperm.xlu0 %426, %v413
        %v428 = vpop.permute.xlu0 %427
        %431 = vset.pattern.permute.xlu0 0
        %432 = vperm.xlu0 %431, %v414
        %v433 = vpop.permute.xlu0 %432
        %436 = vset.pattern.permute.xlu0 0
        %437 = vperm.xlu0 %436, %v415
        %v438 = vpop.permute.xlu0 %437
        %441 = vset.pattern.permute.xlu0 0
        %442 = vperm.xlu0 %441, %v416
        %v443 = vpop.permute.xlu0 %442
        %446 = vset.pattern.permute.xlu0 0
        %447 = vperm.xlu0 %446, %v417
        %v448 = vpop.permute.xlu0 %447
        %451 = vset.pattern.permute.xlu0 0
        %452 = vperm.xlu0 %451, %v418
        %v453 = vpop.permute.xlu0 %452
        %456 = vset.pattern.permute.xlu0 0
        %457 = vperm.xlu0 %456, %v419
        %v458 = vpop.permute.xlu0 %457
        %v460 = vadd.f32 %v396, %v423
        %v461 = vadd.f32 %v397, %v423
        %v462 = vadd.f32 %v398, %v428
        %v463 = vadd.f32 %v399, %v428
        %v464 = vadd.f32 %v400, %v433
        %v465 = vadd.f32 %v401, %v433
        %v466 = vadd.f32 %v402, %v438
        %v467 = vadd.f32 %v403, %v438
        %v468 = vadd.f32 %v404, %v443
        %v469 = vadd.f32 %v405, %v443
        %v470 = vadd.f32 %v406, %v448
        %v471 = vadd.f32 %v407, %v448
        %v472 = vadd.f32 %v408, %v453
        %v473 = vadd.f32 %v409, %v453
        %v474 = vadd.f32 %v410, %v458
        %v475 = vadd.f32 %v411, %v458
        %v476 = vmax.f32 %v460, 0.0
        %v477 = vmax.f32 %v461, 0.0
        %v478 = vmax.f32 %v462, 0.0
        %v479 = vmax.f32 %v463, 0.0
        %v480 = vmax.f32 %v464, 0.0
        %v481 = vmax.f32 %v465, 0.0
        %v482 = vmax.f32 %v466, 0.0
        %v483 = vmax.f32 %v467, 0.0
        %v484 = vmax.f32 %v468, 0.0
        %v485 = vmax.f32 %v469, 0.0
        %v486 = vmax.f32 %v470, 0.0
        %v487 = vmax.f32 %v471, 0.0
        %v488 = vmax.f32 %v472, 0.0
        %v489 = vmax.f32 %v473, 0.0
        %v490 = vmax.f32 %v474, 0.0
        %v491 = vmax.f32 %v475, 0.0
        %492 = vst [vmem:[%s188] sm:$0xff] %v476
        %493 = vst [vmem:[%s188 + $0x8] sm:$0xff] %v477
        %494 = vst [vmem:[%s188 + $0x10] sm:$0xff] %v478
        %495 = vst [vmem:[%s188 + $0x18] sm:$0xff] %v479
        %496 = vst [vmem:[%s188 + $0x20] sm:$0xff] %v480
        %497 = vst [vmem:[%s188 + $0x28] sm:$0xff] %v481
        %498 = vst [vmem:[%s188 + $0x30] sm:$0xff] %v482
        %499 = vst [vmem:[%s188 + $0x38] sm:$0xff] %v483
        %500 = vst [vmem:[%s188 + $0x40] sm:$0xff] %v484
        %501 = vst [vmem:[%s188 + $0x48] sm:$0xff] %v485
        %502 = vst [vmem:[%s188 + $0x50] sm:$0xff] %v486
        %503 = vst [vmem:[%s188 + $0x58] sm:$0xff] %v487
        %504 = vst [vmem:[%s188 + $0x60] sm:$0xff] %v488
        %505 = vst [vmem:[%s188 + $0x68] sm:$0xff] %v489
        %506 = vst [vmem:[%s188 + $0x70] sm:$0xff] %v490
        %507 = vst [vmem:[%s188 + $0x78] sm:$0xff] %v491
        %s508 = sand.u32 %s109, 1
        %s509 = scalar_lea.sflag [#allocation3], %s508
        %s510 = sand.u32 %s109, 1
        %s511 = smul.addr %s510, 128
        %s512 = scalar_lea.vmem [#allocation2], %s511
        // Predicated region
        $region33: #{tpu_custom_call.1} parent=31 // pred_check
          %p513 = pneg %p119
        $region34: #{tpu_custom_call.1} parent=31 // pred_check_branch
          %515 = sbr.rel (%p513) target = $region36
        $region35: #{tpu_custom_call.1} parent=31 // pred_region
          %s516 = smul.u32 2, %s22
          %518 = vsyncadd %s509, 0
          %s519 = smul.addr %s21, 16
          %s520 = sadd.s32 %s516, %s519
          %s521 = smul.addr %s520, 8
          %s522 = scalar_lea.hbm %s3, %s521
          %s523 = sshll.u32 %s512, 4
          %s524 = int_to_ptr.vmem [resolvable:$true] %s523
          %s525 = sshll.u32 %s522, 4
          %s526 = int_to_ptr.hbm [resolvable:$true] %s525
          %531 = dma.vmem_to_hbm [thread:$0]  %s524, 2048, %s526, %s509, 256, 256, 16
        $region36: #{tpu_custom_call.1} parent=31 // pred_fallthru
          _
      $region32: #{tpu_custom_call.1} parent=5 // pred_fallthru
        _
      %p532 = scmp.le.s32.totalorder 2, %s12
      // Predicated region
      $region37: #{tpu_custom_call.1} parent=5 // pred_check
        %p533 = pneg %p532
      $region38: #{tpu_custom_call.1} parent=5 // pred_check_branch
        %535 = sbr.rel (%p533) target = $region40
      $region39: #{tpu_custom_call.1} parent=5 // pred_region
        %s536 = ssub.s32 %s12, 2
        // Predicated region
        $region41: #{tpu_custom_call.1} parent=39 // pred_check
          %p537 = pneg %p125
        $region42: #{tpu_custom_call.1} parent=39 // pred_check_branch
          %539 = sbr.rel (%p537) target = $region44
        $region43: #{tpu_custom_call.1} parent=39 // pred_region
          %s540 = sand.u32 %s110, 1
          %s541 = scalar_lea.sflag [#allocation3], %s540
          %s542 = sand.u32 %s110, 1
          %s543 = smul.addr %s542, 128
          %s544 = scalar_lea.vmem [#allocation2], %s543
          %546 = dma.done %s541, 2048
        $region44: #{tpu_custom_call.1} parent=39 // pred_fallthru
          _
      $region40: #{tpu_custom_call.1} parent=5 // pred_fallthru
        _
    $region6: #{tpu_custom_call.1} parent=1 // loop_footer
      %s16 = sadd.s32 1, %s12
    $region7: #{tpu_custom_call.1} parent=1 // loop_footer_branch
      %11 = sbr.rel target = $region3
    $region8: #{tpu_custom_call.1} parent=1 // loop_exit
      _
    %547 = vsyncpa [#allocation3], 1
    %s548 = scalar_lea.sflag [#allocation3], 1
    %549 = vsyncpa %s548, 1

</llo_original>
